<compile_context>
chip_gen: v7x
topology: tpu7x:2x2x1
jax: 0.10.0
libtpu: 0.0.40
codegen_flags: <defaults>
</compile_context>

<pallas_src>
import jax
import jax.numpy as jnp
from jax.experimental import pallas as pl
from jax.experimental.pallas import tpu as pltpu


def _gelu_new(x):
    # GPT "gelu_new": 0.5*x*(1+tanh(sqrt(2/pi)*(x+0.044715*x^3)))
    return 0.5 * x * (1.0 + jnp.tanh(
        jnp.sqrt(2.0 / jnp.pi) * (x + 0.044715 * x * x * x)))


def _round_up(x, m):
    return ((x + m - 1) // m) * m


def _device_info():
    """Return (vmem_capacity_bytes, device_kind) with safe fallbacks."""
    kind = ""
    try:
        kind = getattr(jax.devices()[0], "device_kind", "") or ""
    except Exception:
        pass
    vmem_cap = None
    try:
        vmem_cap = int(pltpu.get_tpu_info().vmem_capacity_bytes)
    except Exception:
        vmem_cap = None
    if not vmem_cap or vmem_cap <= 0:
        vmem_cap = (64 << 20) if "v7" in kind.lower() else (128 << 20)
    return vmem_cap, kind


def _default_tiles(kind):
    """Per-generation (tm, ti) defaults from the weight-streaming roofline."""
    k = kind.lower()
    if "v7" in k:
        # roofline only needs tm >~ 310; keep working set inside 64 MiB VMEM.
        return 512, 512
    if "v6" in k:
        # tm ~ 918 TF/s / 1.35 TB/s ~ 680 to stay MXU-bound on re-streamed weights.
        return 768, 512
    if "v5 lite" in k or "v5e" in k or "v5lite" in k:
        # smaller ti matches the 4x128^2 MXU and shrinks the live gelu intermediate.
        return 512, 256
    return 512, 512


def _pick_row_tile(m_sub, tm_target, sub):
    """Sublane-aligned row tile <= tm_target minimizing zero-row padding."""
    if m_sub <= tm_target:
        return m_sub
    best_c = tm_target
    best_pad = _round_up(m_sub, tm_target) - m_sub
    c = max(sub, (tm_target // 2) // sub * sub)
    while c <= tm_target:
        pad = _round_up(m_sub, c) - m_sub
        if pad < best_pad or (pad == best_pad and c > best_c):
            best_c, best_pad = c, pad
        c += sub
    return best_c


# ----------------------------------------------------------------------------
# Kernels
# ----------------------------------------------------------------------------

def _transition_kernel_acc(x_ref, w1_ref, b1_ref, w2_ref, b2_ref, o_ref, acc_ref):
    """Streamed-I path: reduce over intermediate-dim tiles into an f32 accumulator."""
    j = pl.program_id(1)

    @pl.when(j == 0)
    def _():
        acc_ref[...] = jnp.zeros_like(acc_ref)

    # fc_in for this intermediate-column tile: bf16 operands, f32 MXU accumulation.
    h = jnp.dot(x_ref[...], w1_ref[...],
                preferred_element_type=jnp.float32)              # (tm, ti) f32
    h = _gelu_new(h + b1_ref[...])                               # f32 activation math

    # Partial fc_out contribution of this I-tile, accumulated in f32.
    acc_ref[...] += jnp.dot(h.astype(w2_ref.dtype), w2_ref[...],
                            preferred_element_type=jnp.float32)  # (tm, H)

    @pl.when(j == pl.num_programs(1) - 1)
    def _():
        # dropout_hidden is identity in eval mode.
        o_ref[...] = (acc_ref[...] + b2_ref[...]).astype(o_ref.dtype)


def _transition_kernel_fused(x_ref, w1_ref, b1_ref, w2_ref, b2_ref, o_ref):
    """Fast path (whole I fits one tile): no accumulator scratch, no init/finalize."""
    h = jnp.dot(x_ref[...], w1_ref[...], preferred_element_type=jnp.float32)
    h = _gelu_new(h + b1_ref[...])
    y = jnp.dot(h.astype(w2_ref.dtype), w2_ref[...],
                preferred_element_type=jnp.float32)
    o_ref[...] = (y + b2_ref[...]).astype(o_ref.dtype)


# ----------------------------------------------------------------------------
# Wrapper
# ----------------------------------------------------------------------------

def tcrgen_transition(hidden_states, w_in, b_in, w_out, b_out, *,
                      tm=None, ti=None, compute_dtype=jnp.bfloat16):
    """hidden_states: [B, S, H]; w_in: [H, I]; b_in: [I]; w_out: [I, H]; b_out: [H].

    Weights are stored [in_features, out_features] so x @ W + b matches
    torch's x @ W.T + b with W stored [out, in].
    """
    B, S, H = hidden_states.shape
    I = w_in.shape[1]
    M = B * S
    out_dtype = hidden_states.dtype

    c_sz = jnp.dtype(compute_dtype).itemsize
    o_sz = jnp.dtype(out_dtype).itemsize
    sub = 8 * max(1, 4 // c_sz)          # sublane packing: f32->8, bf16->16, int8->32

    vmem_cap, kind = _device_info()
    is_v7 = "v7" in kind.lower()
    d_tm, d_ti = _default_tiles(kind)
    tm = d_tm if tm is None else tm
    ti = d_ti if ti is None else ti

    # ---- lane-align H, tile the intermediate dim.
    H_p = _round_up(H, 128)
    ti_eff = min(_round_up(ti, 128), _round_up(I, 128))
    I_p = _round_up(I, ti_eff)
    n_j = I_p // ti_eff
    fused = (n_j == 1)

    # ---- VMEM working-set model (includes in-kernel gelu temporaries).
    def working_set(tm_e):
        w_bufs = 1 if fused else 2
        b = 2 * tm_e * H_p * c_sz                              # x (double-buffered)
        b += w_bufs * (H_p * ti_eff + ti_eff * H_p) * c_sz     # W_in + W_out tiles
        b += 8 * ti_eff * 4 + 8 * H_p * 4                      # biases (f32, padded)
        b += 2 * tm_e * H_p * o_sz                             # output (double-buffered)
        if not fused:
            b += tm_e * H_p * 4                                # f32 accumulator scratch
        b += tm_e * ti_eff * (4 + c_sz)                        # gelu f32 + bf16 cast
        return b

    budget = max(8 << 20, vmem_cap - (6 << 20))

    # ---- row tile: minimize padding waste, fit VMEM, feed both v7x TensorCores.
    M_sub = _round_up(M, sub)
    tm_target = min(_round_up(tm, sub), M_sub)
    tm_eff = _pick_row_tile(M_sub, tm_target, sub)
    while working_set(tm_eff) > budget and tm_eff > sub:
        tm_eff = max(sub, ((tm_eff // 2 + sub - 1) // sub) * sub)
    if is_v7 and _round_up(M_sub, tm_eff) // tm_eff == 1 and M_sub >= 2 * sub:
        tm_eff = _round_up((M_sub + 1) // 2, sub)      # n_i >= 2 -> both TCs busy

    M_p = _round_up(M, tm_eff)
    n_i = M_p // tm_eff

    # ---- pad operands (zero padding is provably neutral: gelu(0)=0, zero rows/cols).
    x2d = hidden_states.reshape(M, H).astype(compute_dtype)
    pad_m, pad_h, pad_i = M_p - M, H_p - H, I_p - I
    if pad_m or pad_h:
        x2d = jnp.pad(x2d, ((0, pad_m), (0, pad_h)))

    w1 = w_in.astype(compute_dtype)
    b1 = b_in.astype(jnp.float32)
    w2 = w_out.astype(compute_dtype)
    b2 = b_out.astype(jnp.float32)
    if pad_h or pad_i:
        w1 = jnp.pad(w1, ((0, pad_h), (0, pad_i)))
    if pad_i:
        b1 = jnp.pad(b1, ((0, pad_i),))
        w2 = jnp.pad(w2, ((0, pad_i), (0, 0)))
    if pad_h:
        w2 = jnp.pad(w2, ((0, 0), (0, pad_h)))
        b2 = jnp.pad(b2, ((0, pad_h),))
    b1 = b1.reshape(1, I_p)
    b2 = b2.reshape(1, H_p)

    # ---- specs / grid.
    if fused:
        grid = (n_i,)
        dims = ("parallel",)
        kernel = _transition_kernel_fused
        scratch = []
        in_specs = [
            pl.BlockSpec((tm_eff, H_p), lambda i: (i, 0)),
            pl.BlockSpec((H_p, ti_eff), lambda i: (0, 0), pipeline_mode=pl.Buffered(1)),
            pl.BlockSpec((1, ti_eff), lambda i: (0, 0), pipeline_mode=pl.Buffered(1)),
            pl.BlockSpec((ti_eff, H_p), lambda i: (0, 0), pipeline_mode=pl.Buffered(1)),
            pl.BlockSpec((1, H_p), lambda i: (0, 0), pipeline_mode=pl.Buffered(1)),
        ]
        out_specs = pl.BlockSpec((tm_eff, H_p), lambda i: (i, 0))
    else:
        grid = (n_i, n_j)
        dims = ("parallel", "arbitrary")
        kernel = _transition_kernel_acc
        scratch = [pltpu.VMEM((tm_eff, H_p), jnp.float32)]
        in_specs = [
            pl.BlockSpec((tm_eff, H_p), lambda i, j: (i, 0)),                  # x rows
            pl.BlockSpec((H_p, ti_eff), lambda i, j: (0, j)),                  # W_in cols
            pl.BlockSpec((1, ti_eff), lambda i, j: (0, j)),                    # b_in
            pl.BlockSpec((ti_eff, H_p), lambda i, j: (j, 0)),                  # W_out rows
            pl.BlockSpec((1, H_p), lambda i, j: (0, 0),
                         pipeline_mode=pl.Buffered(1)),                        # b_out
        ]
        out_specs = pl.BlockSpec((tm_eff, H_p), lambda i, j: (i, 0))

    # ---- scoped VMEM limit: sized from the working set, capped by device capacity.
    vmem_bytes = working_set(tm_eff)
    vmem_limit = int(min(budget, max(vmem_bytes * 1.3 + (2 << 20), 16 << 20)))

    # ---- cost estimate: weights are re-streamed once per row tile when n_j > 1.
    weight_streams = 1 if fused else n_i
    cost = pl.CostEstimate(
        flops=4 * M_p * H_p * I_p,                   # two matmuls (2*M*H*I each)
        transcendentals=M_p * I_p,                   # tanh in gelu_new
        bytes_accessed=(x2d.size * c_sz
                        + weight_streams * (w1.size + w2.size) * c_sz
                        + weight_streams * b1.size * 4 + b2.size * 4
                        + M_p * H_p * o_sz))

    out2d = pl.pallas_call(
        kernel,
        out_shape=jax.ShapeDtypeStruct((M_p, H_p), out_dtype),
        grid_spec=pltpu.PrefetchScalarGridSpec(
            num_scalar_prefetch=0,
            grid=grid,
            in_specs=in_specs,
            out_specs=out_specs,
            scratch_shapes=scratch,
        ),
        compiler_params=pltpu.CompilerParams(
            dimension_semantics=dims,
            vmem_limit_bytes=vmem_limit),
        cost_estimate=cost,
    )(x2d, w1, b1, w2, b2)

    if pad_m or pad_h:
        out2d = out2d[:M, :H]
    return out2d.reshape(B, S, H)


# ----------------------------------------------------------------------------
# Reference + demo
# ----------------------------------------------------------------------------

def _reference(hidden_states, w_in, b_in, w_out, b_out, compute_dtype=jnp.bfloat16):
    # Matches the kernel's numerics: bf16 operands, f32 accumulation, f32 gelu.
    B, S, H = hidden_states.shape
    x2 = hidden_states.reshape(-1, H).astype(compute_dtype)
    h = jnp.dot(x2, w_in.astype(compute_dtype), preferred_element_type=jnp.float32)
    h = h + b_in.astype(jnp.float32)
    h = _gelu_new(h)
    y = jnp.dot(h.astype(compute_dtype), w_out.astype(compute_dtype),
                preferred_element_type=jnp.float32)
    y = y + b_out.astype(jnp.float32)
    return y.reshape(B, S, H).astype(hidden_states.dtype)


if __name__ == "__main__":
    # Small shapes consistent with the module: hidden_dim=128, intermediate=512.
    batch, seq, hidden_dim, intermediate_size = 2, 8, 128, 512

    key = jax.random.PRNGKey(0)
    k_x, k_w1, k_b1, k_w2, k_b2 = jax.random.split(key, 5)

    # init='normal' -> deterministic normal init (std 0.02), biases normal as well.
    x = jax.random.normal(k_x, (batch, seq, hidden_dim), dtype=jnp.float32)
    w_in = 0.02 * jax.random.normal(k_w1, (hidden_dim, intermediate_size), jnp.float32)
    b_in = 0.02 * jax.random.normal(k_b1, (intermediate_size,), jnp.float32)
    w_out = 0.02 * jax.random.normal(k_w2, (intermediate_size, hidden_dim), jnp.float32)
    b_out = 0.02 * jax.random.normal(k_b2, (hidden_dim,), jnp.float32)

    out = tcrgen_transition(x, w_in, b_in, w_out, b_out)
    out = jax.block_until_ready(out)

    ref = _reference(x, w_in, b_in, w_out, b_out)
    assert out.shape == (batch, seq, hidden_dim)
    assert jnp.allclose(out, ref, atol=2e-3, rtol=2e-3), "mismatch vs reference"

    # Also exercise the streamed-I accumulator path (n_j > 1) and odd M / odd H.
    x2 = jax.random.normal(k_x, (3, 7, 96), dtype=jnp.float32)
    w1b = 0.02 * jax.random.normal(k_w1, (96, 384), jnp.float32)
    b1b = 0.02 * jax.random.normal(k_b1, (384,), jnp.float32)
    w2b = 0.02 * jax.random.normal(k_w2, (384, 96), jnp.float32)
    b2b = 0.02 * jax.random.normal(k_b2, (96,), jnp.float32)
    out2 = tcrgen_transition(x2, w1b, b1b, w2b, b2b, ti=128)
    out2 = jax.block_until_ready(out2)
    ref2 = _reference(x2, w1b, b1b, w2b, b2b)
    assert out2.shape == (3, 7, 96)
    assert jnp.allclose(out2, ref2, atol=2e-3, rtol=2e-3), "mismatch vs reference (acc path)"

    print("KERNEL_OK")
</pallas_src>

<mosaic_0001>
module attributes {stable_mosaic.version = 11 : i64} {
  func.func @_transition_kernel_fused(%arg0: i32, %arg1: memref<16x128xbf16, #tpu.memory_space<vmem>>, %arg2: memref<128x512xbf16, #tpu.memory_space<vmem>>, %arg3: memref<1x512xf32, #tpu.memory_space<vmem>>, %arg4: memref<512x128xbf16, #tpu.memory_space<vmem>>, %arg5: memref<1x128xf32, #tpu.memory_space<vmem>>, %arg6: memref<16x128xf32, #tpu.memory_space<vmem>>) attributes {dimension_semantics = [#tpu.dimension_semantics<parallel>], iteration_bounds = array<i64: 1>, scalar_prefetch = 0 : i64, scratch_operands = 0 : i64, tpu.core_type = #tpu.core_type<tc>, window_params = [{transform_indices = @transform_0, window_bounds = array<i64: 16, 128>}, {pipeline_mode = #tpu.pipeline_mode<synchronous>, transform_indices = @transform_1, window_bounds = array<i64: 128, 512>}, {pipeline_mode = #tpu.pipeline_mode<synchronous>, transform_indices = @transform_2, window_bounds = array<i64: 1, 512>}, {pipeline_mode = #tpu.pipeline_mode<synchronous>, transform_indices = @transform_3, window_bounds = array<i64: 512, 128>}, {pipeline_mode = #tpu.pipeline_mode<synchronous>, transform_indices = @transform_4, window_bounds = array<i64: 1, 128>}, {transform_indices = @transform_5, window_bounds = array<i64: 16, 128>}]} {
    %c0 = arith.constant 0 : index
    %c0_0 = arith.constant 0 : index
    %0 = vector.load %arg1[%c0, %c0_0] : memref<16x128xbf16, #tpu.memory_space<vmem>>, vector<16x128xbf16>
    %c0_1 = arith.constant 0 : index
    %c0_2 = arith.constant 0 : index
    %1 = vector.load %arg2[%c0_1, %c0_2] : memref<128x512xbf16, #tpu.memory_space<vmem>>, vector<128x512xbf16>
    %cst = arith.constant dense<0.000000e+00> : vector<16x512xf32>
    %2 = tpu.matmul %0, %1, %cst {dimension_numbers = #tpu.dot_dimension_numbers<[1], [0], [0], [1], [0, 0, 1, 1], [], []>} : vector<16x128xbf16>, vector<128x512xbf16>, vector<16x512xf32> -> vector<16x512xf32>
    %c0_3 = arith.constant 0 : index
    %c0_4 = arith.constant 0 : index
    %3 = vector.load %arg3[%c0_3, %c0_4] : memref<1x512xf32, #tpu.memory_space<vmem>>, vector<1x512xf32>
    %4 = vector.broadcast %3 : vector<1x512xf32> to vector<16x512xf32>
    %5 = arith.addf %2, %4 : vector<16x512xf32>
    %cst_5 = arith.constant 5.000000e-01 : f32
    %6 = vector.broadcast %cst_5 : f32 to vector<16x512xf32>
    %7 = arith.mulf %6, %5 : vector<16x512xf32>
    %cst_6 = arith.constant 0.636619746 : f32
    %8 = math.sqrt %cst_6 : f32
    %cst_7 = arith.constant 4.471500e-02 : f32
    %9 = vector.broadcast %cst_7 : f32 to vector<16x512xf32>
    %10 = arith.mulf %9, %5 : vector<16x512xf32>
    %11 = arith.mulf %10, %5 : vector<16x512xf32>
    %12 = arith.mulf %11, %5 : vector<16x512xf32>
    %13 = arith.addf %5, %12 : vector<16x512xf32>
    %14 = vector.broadcast %8 : f32 to vector<16x512xf32>
    %15 = arith.mulf %14, %13 : vector<16x512xf32>
    %16 = math.tanh %15 : vector<16x512xf32>
    %cst_8 = arith.constant 1.000000e+00 : f32
    %17 = vector.broadcast %cst_8 : f32 to vector<16x512xf32>
    %18 = arith.addf %17, %16 : vector<16x512xf32>
    %19 = arith.mulf %7, %18 : vector<16x512xf32>
    %20 = arith.truncf %19 : vector<16x512xf32> to vector<16x512xbf16>
    %c0_9 = arith.constant 0 : index
    %c0_10 = arith.constant 0 : index
    %21 = vector.load %arg4[%c0_9, %c0_10] : memref<512x128xbf16, #tpu.memory_space<vmem>>, vector<512x128xbf16>
    %cst_11 = arith.constant dense<0.000000e+00> : vector<16x128xf32>
    %22 = tpu.matmul %20, %21, %cst_11 {dimension_numbers = #tpu.dot_dimension_numbers<[1], [0], [0], [1], [0, 0, 1, 1], [], []>} : vector<16x512xbf16>, vector<512x128xbf16>, vector<16x128xf32> -> vector<16x128xf32>
    %c0_12 = arith.constant 0 : index
    %c0_13 = arith.constant 0 : index
    %23 = vector.load %arg5[%c0_12, %c0_13] : memref<1x128xf32, #tpu.memory_space<vmem>>, vector<1x128xf32>
    %24 = vector.broadcast %23 : vector<1x128xf32> to vector<16x128xf32>
    %25 = arith.addf %22, %24 : vector<16x128xf32>
    %c0_14 = arith.constant 0 : index
    %c0_15 = arith.constant 0 : index
    %26 = vector.load %arg6[%c0_14, %c0_15] : memref<16x128xf32, #tpu.memory_space<vmem>>, vector<16x128xf32>
    tpu.vector_store %arg6[%c0_14, %c0_15], %25 {strides = array<i32>} : memref<16x128xf32, #tpu.memory_space<vmem>>, vector<16x128xf32>,
    return
  }
  func.func @transform_0(%arg0: i32) -> (i32, i32) {
    %c0_i32 = arith.constant 0 : i32
    %c0_i32_0 = arith.constant 0 : i32
    return %arg0, %c0_i32 : i32, i32
  }
  func.func @transform_1(%arg0: i32) -> (i32, i32) {
    %c0_i32 = arith.constant 0 : i32
    %c0_i32_0 = arith.constant 0 : i32
    %c0_i32_1 = arith.constant 0 : i32
    return %c0_i32, %c0_i32_0 : i32, i32
  }
  func.func @transform_2(%arg0: i32) -> (i32, i32) {
    %c0_i32 = arith.constant 0 : i32
    %c0_i32_0 = arith.constant 0 : i32
    %c0_i32_1 = arith.constant 0 : i32
    return %c0_i32, %c0_i32_0 : i32, i32
  }
  func.func @transform_3(%arg0: i32) -> (i32, i32) {
    %c0_i32 = arith.constant 0 : i32
    %c0_i32_0 = arith.constant 0 : i32
    %c0_i32_1 = arith.constant 0 : i32
    return %c0_i32, %c0_i32_0 : i32, i32
  }
  func.func @transform_4(%arg0: i32) -> (i32, i32) {
    %c0_i32 = arith.constant 0 : i32
    %c0_i32_0 = arith.constant 0 : i32
    %c0_i32_1 = arith.constant 0 : i32
    return %c0_i32, %c0_i32_0 : i32, i32
  }
  func.func @transform_5(%arg0: i32) -> (i32, i32) {
    %c0_i32 = arith.constant 0 : i32
    %c0_i32_0 = arith.constant 0 : i32
    return %arg0, %c0_i32 : i32, i32
  }
}

</mosaic_0001>

<llo_original>
// kernel: tpu_custom_call.1
$region0: #{tpu_custom_call.1}
  #allocation0 [shape = 'u32[]', space=smem, size = 0x4, offset = 0x4, fixed_abs, tag = 'smem constant byte address 0x4 - core index']
  #allocation1 [shape = 'u32[144,128]{1,0:T(1,128)}', space=vmem, size = 0x12000, scoped, tag = 'internal scratch']
  %s0 = inlined_call_operand.hbm [shape: bf16[16,128], index: 0, kind: input, shape index: {}]
  %s1 = inlined_call_operand.hbm [shape: bf16[128,512], index: 1, kind: input, shape index: {}]
  %s2 = inlined_call_operand.vmem [shape: f32[1,512], index: 2, kind: input, shape index: {}]
  %s3 = inlined_call_operand.hbm [shape: bf16[512,128], index: 3, kind: input, shape index: {}]
  %s4 = inlined_call_operand.vmem [shape: f32[1,128], index: 4, kind: input, shape index: {}]
  %s5 = inlined_call_operand.hbm [shape: f32[16,128], index: 5, kind: output, shape index: {}]
  %s6 = sld [smem:[#allocation0]]
  $region42: #{tpu_custom_call.1} parent=0
    _
  %s8 = ssub.s32 1, %s6
  %s9 = scalar_select 0, %s8, %s6
  $region1: #{tpu_custom_call.1} parent=0
    #allocation2 [shape = 'u8[4096]{0}', space=vmem, size = 0x1000, scoped, tag = 'input window, operand 0, single buffered']
    #allocation3 [shape = 's32[1]{0}', space=sflag, size = 0x4, scoped, tag = 'scoped memory for tpu_custom_call.1']
    #allocation4 [shape = 's32[1]{0}', space=sflag, size = 0x4, scoped, tag = 'scoped memory for tpu_custom_call.1']
    #allocation5 [shape = 'u8[131072]{0}', space=vmem, size = 0x20000, scoped, tag = 'input window, operand 1, single buffered']
    #allocation6 [shape = 's32[1]{0}', space=sflag, size = 0x4, scoped, tag = 'scoped memory for tpu_custom_call.1']
    #allocation7 [shape = 'u8[131072]{0}', space=vmem, size = 0x20000, scoped, tag = 'input window, operand 3, single buffered']
    #allocation8 [shape = 'u8[8192]{0}', space=vmem, size = 0x2000, scoped, tag = 'output window, operand 0, single buffered']
    %10 = vsyncpa [#allocation3], 0
    %11 = vsyncpa [#allocation6], 0
    %12 = vsyncpa [#allocation4], 0
    // Predicated region
    $region2: #{tpu_custom_call.1} parent=1 // pred_check
      _
    $region3: #{tpu_custom_call.1} parent=1 // pred_check_branch
      %14 = sbr.rel (0) target = $region5
    $region4: #{tpu_custom_call.1} parent=1 // pred_region
      %s16 = ssub.s32 128, 128
      %17 = vsyncadd [#allocation3], %s16
      %s18 = sshll.u32 [#allocation2], 4
      %s19 = int_to_ptr.vmem [resolvable:$true] %s18
      %24 = dma.hbm_to_vmem [thread:$0]  %s0, 128, %s19, [#allocation3], 64, 64, 4
    $region5: #{tpu_custom_call.1} parent=1 // pred_fallthru
      _
    // Predicated region
    $region6: #{tpu_custom_call.1} parent=1 // pred_check
      _
    $region7: #{tpu_custom_call.1} parent=1 // pred_check_branch
      %26 = sbr.rel (0) target = $region9
    $region8: #{tpu_custom_call.1} parent=1 // pred_region
      %s28 = ssub.s32 4096, 4096
      %29 = vsyncadd [#allocation6], %s28
      %s30 = sshll.u32 [#allocation5], 4
      %s31 = int_to_ptr.vmem [resolvable:$true] %s30
      %36 = dma.hbm_to_vmem [thread:$0]  %s1, 4096, %s31, [#allocation6], 256, 256, 16
    $region9: #{tpu_custom_call.1} parent=1 // pred_fallthru
      _
    // Predicated region
    $region10: #{tpu_custom_call.1} parent=1 // pred_check
      _
    $region11: #{tpu_custom_call.1} parent=1 // pred_check_branch
      %38 = sbr.rel (0) target = $region13
    $region12: #{tpu_custom_call.1} parent=1 // pred_region
      _
    $region13: #{tpu_custom_call.1} parent=1 // pred_fallthru
      _
    // Predicated region
    $region14: #{tpu_custom_call.1} parent=1 // pred_check
      _
    $region15: #{tpu_custom_call.1} parent=1 // pred_check_branch
      %40 = sbr.rel (0) target = $region17
    $region16: #{tpu_custom_call.1} parent=1 // pred_region
      %s42 = ssub.s32 4096, 4096
      %43 = vsyncadd [#allocation6], %s42
      %s44 = sshll.u32 [#allocation7], 4
      %s45 = int_to_ptr.vmem [resolvable:$true] %s44
      %50 = dma.hbm_to_vmem [thread:$0]  %s3, 4096, %s45, [#allocation6], 64, 64, 4
    $region17: #{tpu_custom_call.1} parent=1 // pred_fallthru
      _
    // Predicated region
    $region18: #{tpu_custom_call.1} parent=1 // pred_check
      _
    $region19: #{tpu_custom_call.1} parent=1 // pred_check_branch
      %52 = sbr.rel (0) target = $region21
    $region20: #{tpu_custom_call.1} parent=1 // pred_region
      _
    $region21: #{tpu_custom_call.1} parent=1 // pred_fallthru
      _
    // Predicated region
    $region22: #{tpu_custom_call.1} parent=1 // pred_check
      _
    $region23: #{tpu_custom_call.1} parent=1 // pred_check_branch
      %54 = sbr.rel (0) target = $region25
    $region24: #{tpu_custom_call.1} parent=1 // pred_region
      %55 = dma.done [#allocation3], 128
    $region25: #{tpu_custom_call.1} parent=1 // pred_fallthru
      _
    // Predicated region
    $region26: #{tpu_custom_call.1} parent=1 // pred_check
      _
    $region27: #{tpu_custom_call.1} parent=1 // pred_check_branch
      %57 = sbr.rel (0) target = $region29
    $region28: #{tpu_custom_call.1} parent=1 // pred_region
      %58 = dma.done [#allocation6], 4096
    $region29: #{tpu_custom_call.1} parent=1 // pred_fallthru
      _
    // Predicated region
    $region30: #{tpu_custom_call.1} parent=1 // pred_check
      _
    $region31: #{tpu_custom_call.1} parent=1 // pred_check_branch
      %60 = sbr.rel (0) target = $region33
    $region32: #{tpu_custom_call.1} parent=1 // pred_region
      %61 = dma.done [#allocation6], 4096
    $region33: #{tpu_custom_call.1} parent=1 // pred_fallthru
      _
    %v63 = vld [vmem:[#allocation2] sm:$0xf]
    %v64 = vld [vmem:[#allocation2 + $0x4] sm:$0xf]
    %v65 = vld [vmem:[#allocation5] sm:$0xff]
    %v66 = vld [vmem:[#allocation5 + $0x8] sm:$0xff]
    %v67 = vld [vmem:[#allocation5 + $0x10] sm:$0xff]
    %v68 = vld [vmem:[#allocation5 + $0x18] sm:$0xff]
    %v69 = vld [vmem:[#allocation5 + $0x20] sm:$0xff]
    %v70 = vld [vmem:[#allocation5 + $0x28] sm:$0xff]
    %v71 = vld [vmem:[#allocation5 + $0x30] sm:$0xff]
    %v72 = vld [vmem:[#allocation5 + $0x38] sm:$0xff]
    %v73 = vld [vmem:[#allocation5 + $0x40] sm:$0xff]
    %v74 = vld [vmem:[#allocation5 + $0x48] sm:$0xff]
    %v75 = vld [vmem:[#allocation5 + $0x50] sm:$0xff]
    %v76 = vld [vmem:[#allocation5 + $0x58] sm:$0xff]
    %v77 = vld [vmem:[#allocation5 + $0x60] sm:$0xff]
    %v78 = vld [vmem:[#allocation5 + $0x68] sm:$0xff]
    %v79 = vld [vmem:[#allocation5 + $0x70] sm:$0xff]
    %v80 = vld [vmem:[#allocation5 + $0x78] sm:$0xff]
    %v81 = vld [vmem:[#allocation5 + $0x80] sm:$0xff]
    %v82 = vld [vmem:[#allocation5 + $0x88] sm:$0xff]
    %v83 = vld [vmem:[#allocation5 + $0x90] sm:$0xff]
    %v84 = vld [vmem:[#allocation5 + $0x98] sm:$0xff]
    %v85 = vld [vmem:[#allocation5 + $0xa0] sm:$0xff]
    %v86 = vld [vmem:[#allocation5 + $0xa8] sm:$0xff]
    %v87 = vld [vmem:[#allocation5 + $0xb0] sm:$0xff]
    %v88 = vld [vmem:[#allocation5 + $0xb8] sm:$0xff]
    %v89 = vld [vmem:[#allocation5 + $0xc0] sm:$0xff]
    %v90 = vld [vmem:[#allocation5 + $0xc8] sm:$0xff]
    %v91 = vld [vmem:[#allocation5 + $0xd0] sm:$0xff]
    %v92 = vld [vmem:[#allocation5 + $0xd8] sm:$0xff]
    %v93 = vld [vmem:[#allocation5 + $0xe0] sm:$0xff]
    %v94 = vld [vmem:[#allocation5 + $0xe8] sm:$0xff]
    %v95 = vld [vmem:[#allocation5 + $0xf0] sm:$0xff]
    %v96 = vld [vmem:[#allocation5 + $0xf8] sm:$0xff]
    %v97 = vld [vmem:[%s2] sm:$0xf]
    %v99 = vlaneseq
    %v100 = vshrl.u32 %v99, 7
    %v101 = vsub.s32 0, %v100
    %v102 = vrot.slane %v97, %v101
    %v103 = vlaneseq
    %v104 = vshrl.u32 %v103, 7
    %v105 = vsub.s32 1, %v104
    %v106 = vrot.slane %v97, %v105
    %v107 = vlaneseq
    %v108 = vshrl.u32 %v107, 7
    %v109 = vsub.s32 2, %v108
    %v110 = vrot.slane %v97, %v109
    %v111 = vlaneseq
    %v112 = vshrl.u32 %v111, 7
    %v113 = vsub.s32 3, %v112
    %v114 = vrot.slane %v97, %v113
    %v121 = vunpack.c.l.b16 %v63
    %v122 = vunpack.c.l.b16 %v64
    %v123 = vpack.c.b16 %v122, %v121
    %v157 = vunpack.c.l.b16 %v65
    %v158 = vunpack.c.h.b16 %v65
    %v159 = vunpack.c.l.b16 %v66
    %v160 = vunpack.c.h.b16 %v66
    %v161 = vunpack.c.l.b16 %v67
    %v162 = vunpack.c.h.b16 %v67
    %v163 = vunpack.c.l.b16 %v68
    %v164 = vunpack.c.h.b16 %v68
    %v165 = vunpack.c.l.b16 %v69
    %v166 = vunpack.c.h.b16 %v69
    %v167 = vunpack.c.l.b16 %v70
    %v168 = vunpack.c.h.b16 %v70
    %v169 = vunpack.c.l.b16 %v71
    %v170 = vunpack.c.h.b16 %v71
    %v171 = vunpack.c.l.b16 %v72
    %v172 = vunpack.c.h.b16 %v72
    %v173 = vunpack.c.l.b16 %v73
    %v174 = vunpack.c.h.b16 %v73
    %v175 = vunpack.c.l.b16 %v74
    %v176 = vunpack.c.h.b16 %v74
    %v177 = vunpack.c.l.b16 %v75
    %v178 = vunpack.c.h.b16 %v75
    %v179 = vunpack.c.l.b16 %v76
    %v180 = vunpack.c.h.b16 %v76
    %v181 = vunpack.c.l.b16 %v77
    %v182 = vunpack.c.h.b16 %v77
    %v183 = vunpack.c.l.b16 %v78
    %v184 = vunpack.c.h.b16 %v78
    %v185 = vunpack.c.l.b16 %v79
    %v186 = vunpack.c.h.b16 %v79
    %v187 = vunpack.c.l.b16 %v80
    %v188 = vunpack.c.h.b16 %v80
    %v189 = vunpack.c.l.b16 %v81
    %v190 = vunpack.c.h.b16 %v81
    %v191 = vunpack.c.l.b16 %v82
    %v192 = vunpack.c.h.b16 %v82
    %v193 = vunpack.c.l.b16 %v83
    %v194 = vunpack.c.h.b16 %v83
    %v195 = vunpack.c.l.b16 %v84
    %v196 = vunpack.c.h.b16 %v84
    %v197 = vunpack.c.l.b16 %v85
    %v198 = vunpack.c.h.b16 %v85
    %v199 = vunpack.c.l.b16 %v86
    %v200 = vunpack.c.h.b16 %v86
    %v201 = vunpack.c.l.b16 %v87
    %v202 = vunpack.c.h.b16 %v87
    %v203 = vunpack.c.l.b16 %v88
    %v204 = vunpack.c.h.b16 %v88
    %v205 = vunpack.c.l.b16 %v89
    %v206 = vunpack.c.h.b16 %v89
    %v207 = vunpack.c.l.b16 %v90
    %v208 = vunpack.c.h.b16 %v90
    %v209 = vunpack.c.l.b16 %v91
    %v210 = vunpack.c.h.b16 %v91
    %v211 = vunpack.c.l.b16 %v92
    %v212 = vunpack.c.h.b16 %v92
    %v213 = vunpack.c.l.b16 %v93
    %v214 = vunpack.c.h.b16 %v93
    %v215 = vunpack.c.l.b16 %v94
    %v216 = vunpack.c.h.b16 %v94
    %v217 = vunpack.c.l.b16 %v95
    %v218 = vunpack.c.h.b16 %v95
    %v219 = vunpack.c.l.b16 %v96
    %v220 = vunpack.c.h.b16 %v96
    %v221 = vpack.c.b16 %v161, %v157
    %v222 = vpack.c.b16 %v162, %v158
    %v223 = vpack.c.b16 %v163, %v159
    %v224 = vpack.c.b16 %v164, %v160
    %v225 = vpack.c.b16 %v169, %v165
    %v226 = vpack.c.b16 %v170, %v166
    %v227 = vpack.c.b16 %v171, %v167
    %v228 = vpack.c.b16 %v172, %v168
    %v229 = vpack.c.b16 %v177, %v173
    %v230 = vpack.c.b16 %v178, %v174
    %v231 = vpack.c.b16 %v179, %v175
    %v232 = vpack.c.b16 %v180, %v176
    %v233 = vpack.c.b16 %v185, %v181
    %v234 = vpack.c.b16 %v186, %v182
    %v235 = vpack.c.b16 %v187, %v183
    %v236 = vpack.c.b16 %v188, %v184
    %v237 = vpack.c.b16 %v193, %v189
    %v238 = vpack.c.b16 %v194, %v190
    %v239 = vpack.c.b16 %v195, %v191
    %v240 = vpack.c.b16 %v196, %v192
    %v241 = vpack.c.b16 %v201, %v197
    %v242 = vpack.c.b16 %v202, %v198
    %v243 = vpack.c.b16 %v203, %v199
    %v244 = vpack.c.b16 %v204, %v200
    %v245 = vpack.c.b16 %v209, %v205
    %v246 = vpack.c.b16 %v210, %v206
    %v247 = vpack.c.b16 %v211, %v207
    %v248 = vpack.c.b16 %v212, %v208
    %v249 = vpack.c.b16 %v217, %v213
    %v250 = vpack.c.b16 %v218, %v214
    %v251 = vpack.c.b16 %v219, %v215
    %v252 = vpack.c.b16 %v220, %v216
    %285 = vmatprep.subr.bf16.mxu0 %v222
    %286 = vmatpush1.bf16.msra.mxu0 %v221
    %287 = vmatprep.subr.bf16.mxu0 %v226
    %288 = vmatpush1.bf16.msra.mxu0 %v225
    %289 = vmatprep.subr.bf16.mxu0 %v230
    %290 = vmatpush1.bf16.msra.mxu0 %v229
    %291 = vmatprep.subr.bf16.mxu0 %v234
    %292 = vmatpush1.bf16.msra.mxu0 %v233
    %293 = vmatprep.subr.bf16.mxu0 %v238
    %294 = vmatpush1.bf16.msra.mxu0 %v237
    %295 = vmatprep.subr.bf16.mxu0 %v242
    %296 = vmatpush1.bf16.msra.mxu0 %v241
    %297 = vmatprep.subr.bf16.mxu0 %v246
    %298 = vmatpush1.bf16.msra.mxu0 %v245
    %299 = vmatprep.subr.bf16.mxu0 %v250
    %300 = vmatpush1.bf16.msra.mxu0 %v249
    %301 = vmatprep.subr.bf16.mxu0 0
    %302 = vmatpush1.bf16.msra.mxu0 0
    %303 = vmatprep.subr.bf16.mxu0 0
    %304 = vmatpush1.bf16.msra.mxu0 0
    %305 = vmatprep.subr.bf16.mxu0 0
    %306 = vmatpush1.bf16.msra.mxu0 0
    %307 = vmatprep.subr.bf16.mxu0 0
    %308 = vmatpush1.bf16.msra.mxu0 0
    %309 = vmatprep.subr.bf16.mxu0 0
    %310 = vmatpush1.bf16.msra.mxu0 0
    %311 = vmatprep.subr.bf16.mxu0 0
    %312 = vmatpush1.bf16.msra.mxu0 0
    %313 = vmatprep.subr.bf16.mxu0 0
    %314 = vmatpush1.bf16.msra.mxu0 0
    %315 = vmatprep.subr.bf16.mxu0 0
    %316 = vmatpush1.bf16.msra.mxu0 0
    %317 = vmatprep.mubr.bf16.mxu0 0
    %318 = vmatmul.mubr.bf16.gmra.mrb[0].mxu0 %v123
    %v319 = vpop.f32.mrb[0].mxu0
    %v320 = vadd.f32 %v102, %v319
    %v321 = vpop.f32.mrb[0].mxu0
    %v322 = vadd.f32 %v106, %v321
    %v323 = vpop.f32.mrb[0].mxu0
    %v324 = vadd.f32 %v102, %v323
    %v325 = vpop.f32.mrb[0].mxu0
    %v326 = vadd.f32 %v106, %v325
    %327 = vdwg.mxu0
    %328 = vmatprep.subr.bf16.mxu0 %v224
    %329 = vmatpush1.bf16.msra.mxu0 %v223
    %330 = vmatprep.subr.bf16.mxu0 %v228
    %331 = vmatpush1.bf16.msra.mxu0 %v227
    %332 = vmatprep.subr.bf16.mxu0 %v232
    %333 = vmatpush1.bf16.msra.mxu0 %v231
    %334 = vmatprep.subr.bf16.mxu0 %v236
    %335 = vmatpush1.bf16.msra.mxu0 %v235
    %336 = vmatprep.subr.bf16.mxu0 %v240
    %337 = vmatpush1.bf16.msra.mxu0 %v239
    %338 = vmatprep.subr.bf16.mxu0 %v244
    %339 = vmatpush1.bf16.msra.mxu0 %v243
    %340 = vmatprep.subr.bf16.mxu0 %v248
    %341 = vmatpush1.bf16.msra.mxu0 %v247
    %342 = vmatprep.subr.bf16.mxu0 %v252
    %343 = vmatpush1.bf16.msra.mxu0 %v251
    %344 = vmatprep.subr.bf16.mxu0 0
    %345 = vmatpush1.bf16.msra.mxu0 0
    %346 = vmatprep.subr.bf16.mxu0 0
    %347 = vmatpush1.bf16.msra.mxu0 0
    %348 = vmatprep.subr.bf16.mxu0 0
    %349 = vmatpush1.bf16.msra.mxu0 0
    %350 = vmatprep.subr.bf16.mxu0 0
    %351 = vmatpush1.bf16.msra.mxu0 0
    %352 = vmatprep.subr.bf16.mxu0 0
    %353 = vmatpush1.bf16.msra.mxu0 0
    %354 = vmatprep.subr.bf16.mxu0 0
    %355 = vmatpush1.bf16.msra.mxu0 0
    %356 = vmatprep.subr.bf16.mxu0 0
    %357 = vmatpush1.bf16.msra.mxu0 0
    %358 = vmatprep.subr.bf16.mxu0 0
    %359 = vmatpush1.bf16.msra.mxu0 0
    %360 = vmatprep.mubr.bf16.mxu0 0
    %361 = vmatmul.mubr.bf16.gmra.mrb[0].mxu0 %v123
    %v362 = vpop.f32.mrb[0].mxu0
    %v363 = vadd.f32 %v110, %v362
    %v364 = vpop.f32.mrb[0].mxu0
    %v365 = vadd.f32 %v114, %v364
    %v366 = vpop.f32.mrb[0].mxu0
    %v367 = vadd.f32 %v110, %v366
    %v368 = vpop.f32.mrb[0].mxu0
    %v369 = vadd.f32 %v114, %v368
    %370 = vdwg.mxu0
    %v371 = vmul.f32 %v320, 0.5
    %v372 = vmul.f32 %v322, 0.5
    %v373 = vmul.f32 %v363, 0.5
    %v374 = vmul.f32 %v365, 0.5
    %v375 = vmul.f32 %v324, 0.5
    %v376 = vmul.f32 %v326, 0.5
    %v377 = vmul.f32 %v367, 0.5
    %v378 = vmul.f32 %v369, 0.5
    %v379 = vmul.f32 %v320, 0.044715
    %v380 = vmul.f32 %v322, 0.044715
    %v381 = vmul.f32 %v363, 0.044715
    %v382 = vmul.f32 %v365, 0.044715
    %v383 = vmul.f32 %v324, 0.044715
    %v384 = vmul.f32 %v326, 0.044715
    %v385 = vmul.f32 %v367, 0.044715
    %v386 = vmul.f32 %v369, 0.044715
    %v387 = vmul.f32 %v379, %v320
    %v388 = vmul.f32 %v380, %v322
    %v389 = vmul.f32 %v381, %v363
    %v390 = vmul.f32 %v382, %v365
    %v391 = vmul.f32 %v383, %v324
    %v392 = vmul.f32 %v384, %v326
    %v393 = vmul.f32 %v385, %v367
    %v394 = vmul.f32 %v386, %v369
    %v395 = vmul.f32 %v387, %v320
    %v396 = vmul.f32 %v388, %v322
    %v397 = vmul.f32 %v389, %v363
    %v398 = vmul.f32 %v390, %v365
    %v399 = vmul.f32 %v391, %v324
    %v400 = vmul.f32 %v392, %v326
    %v401 = vmul.f32 %v393, %v367
    %v402 = vmul.f32 %v394, %v369
    %v403 = vadd.f32 %v320, %v395
    %v404 = vadd.f32 %v322, %v396
    %v405 = vadd.f32 %v363, %v397
    %v406 = vadd.f32 %v365, %v398
    %v407 = vadd.f32 %v324, %v399
    %v408 = vadd.f32 %v326, %v400
    %v409 = vadd.f32 %v367, %v401
    %v410 = vadd.f32 %v369, %v402
    %v411 = vmul.f32 %v403, 0.7978845
    %v412 = vmul.f32 %v404, 0.7978845
    %v413 = vmul.f32 %v405, 0.7978845
    %v414 = vmul.f32 %v406, 0.7978845
    %v415 = vmul.f32 %v407, 0.7978845
    %v416 = vmul.f32 %v408, 0.7978845
    %v417 = vmul.f32 %v409, 0.7978845
    %v418 = vmul.f32 %v410, 0.7978845
    %v419 = vtanh.pop %v411
    %v420 = vtanh.pop %v412
    %v421 = vtanh.pop %v413
    %v422 = vtanh.pop %v414
    %v423 = vtanh.pop %v415
    %v424 = vtanh.pop %v416
    %v425 = vtanh.pop %v417
    %v426 = vtanh.pop %v418
    %v427 = vadd.f32 %v419, 1.0
    %v428 = vadd.f32 %v420, 1.0
    %v429 = vadd.f32 %v421, 1.0
    %v430 = vadd.f32 %v422, 1.0
    %v431 = vadd.f32 %v423, 1.0
    %v432 = vadd.f32 %v424, 1.0
    %v433 = vadd.f32 %v425, 1.0
    %v434 = vadd.f32 %v426, 1.0
    %v435 = vmul.f32 %v371, %v427
    %v436 = vmul.f32 %v372, %v428
    %v437 = vmul.f32 %v373, %v429
    %v438 = vmul.f32 %v374, %v430
    %v439 = vmul.f32 %v375, %v431
    %v440 = vmul.f32 %v376, %v432
    %v441 = vmul.f32 %v377, %v433
    %v442 = vmul.f32 %v378, %v434
    %v443 = vpack.c.bf16 %v439, %v435
    %v444 = vpack.c.bf16 %v440, %v436
    %v445 = vpack.c.bf16 %v441, %v437
    %v446 = vpack.c.bf16 %v442, %v438
    %v447 = vld [vmem:[#allocation7] sm:$0xf]
    %v448 = vld [vmem:[#allocation7 + $0x4] sm:$0xf]
    %v449 = vld [vmem:[#allocation7 + $0x8] sm:$0xf]
    %v450 = vld [vmem:[#allocation7 + $0xc] sm:$0xf]
    %v451 = vld [vmem:[#allocation7 + $0x10] sm:$0xf]
    %v452 = vld [vmem:[#allocation7 + $0x14] sm:$0xf]
    %v453 = vld [vmem:[#allocation7 + $0x18] sm:$0xf]
    %v454 = vld [vmem:[#allocation7 + $0x1c] sm:$0xf]
    %v455 = vld [vmem:[#allocation7 + $0x20] sm:$0xf]
    %v456 = vld [vmem:[#allocation7 + $0x24] sm:$0xf]
    %v457 = vld [vmem:[#allocation7 + $0x28] sm:$0xf]
    %v458 = vld [vmem:[#allocation7 + $0x2c] sm:$0xf]
    %v459 = vld [vmem:[#allocation7 + $0x30] sm:$0xf]
    %v460 = vld [vmem:[#allocation7 + $0x34] sm:$0xf]
    %v461 = vld [vmem:[#allocation7 + $0x38] sm:$0xf]
    %v462 = vld [vmem:[#allocation7 + $0x3c] sm:$0xf]
    %v463 = vld [vmem:[#allocation7 + $0x40] sm:$0xf]
    %v464 = vld [vmem:[#allocation7 + $0x44] sm:$0xf]
    %v465 = vld [vmem:[#allocation7 + $0x48] sm:$0xf]
    %v466 = vld [vmem:[#allocation7 + $0x4c] sm:$0xf]
    %v467 = vld [vmem:[#allocation7 + $0x50] sm:$0xf]
    %v468 = vld [vmem:[#allocation7 + $0x54] sm:$0xf]
    %v469 = vld [vmem:[#allocation7 + $0x58] sm:$0xf]
    %v470 = vld [vmem:[#allocation7 + $0x5c] sm:$0xf]
    %v471 = vld [vmem:[#allocation7 + $0x60] sm:$0xf]
    %v472 = vld [vmem:[#allocation7 + $0x64] sm:$0xf]
    %v473 = vld [vmem:[#allocation7 + $0x68] sm:$0xf]
    %v474 = vld [vmem:[#allocation7 + $0x6c] sm:$0xf]
    %v475 = vld [vmem:[#allocation7 + $0x70] sm:$0xf]
    %v476 = vld [vmem:[#allocation7 + $0x74] sm:$0xf]
    %v477 = vld [vmem:[#allocation7 + $0x78] sm:$0xf]
    %v478 = vld [vmem:[#allocation7 + $0x7c] sm:$0xf]
    %v479 = vld [vmem:[#allocation7 + $0x80] sm:$0xf]
    %v480 = vld [vmem:[#allocation7 + $0x84] sm:$0xf]
    %v481 = vld [vmem:[#allocation7 + $0x88] sm:$0xf]
    %v482 = vld [vmem:[#allocation7 + $0x8c] sm:$0xf]
    %v483 = vld [vmem:[#allocation7 + $0x90] sm:$0xf]
    %v484 = vld [vmem:[#allocation7 + $0x94] sm:$0xf]
    %v485 = vld [vmem:[#allocation7 + $0x98] sm:$0xf]
    %v486 = vld [vmem:[#allocation7 + $0x9c] sm:$0xf]
    %v487 = vld [vmem:[#allocation7 + $0xa0] sm:$0xf]
    %v488 = vld [vmem:[#allocation7 + $0xa4] sm:$0xf]
    %v489 = vld [vmem:[#allocation7 + $0xa8] sm:$0xf]
    %v490 = vld [vmem:[#allocation7 + $0xac] sm:$0xf]
    %v491 = vld [vmem:[#allocation7 + $0xb0] sm:$0xf]
    %v492 = vld [vmem:[#allocation7 + $0xb4] sm:$0xf]
    %v493 = vld [vmem:[#allocation7 + $0xb8] sm:$0xf]
    %v494 = vld [vmem:[#allocation7 + $0xbc] sm:$0xf]
    %v495 = vld [vmem:[#allocation7 + $0xc0] sm:$0xf]
    %v496 = vld [vmem:[#allocation7 + $0xc4] sm:$0xf]
    %v497 = vld [vmem:[#allocation7 + $0xc8] sm:$0xf]
    %v498 = vld [vmem:[#allocation7 + $0xcc] sm:$0xf]
    %v499 = vld [vmem:[#allocation7 + $0xd0] sm:$0xf]
    %v500 = vld [vmem:[#allocation7 + $0xd4] sm:$0xf]
    %v501 = vld [vmem:[#allocation7 + $0xd8] sm:$0xf]
    %v502 = vld [vmem:[#allocation7 + $0xdc] sm:$0xf]
    %v503 = vld [vmem:[#allocation7 + $0xe0] sm:$0xf]
    %v504 = vld [vmem:[#allocation7 + $0xe4] sm:$0xf]
    %v505 = vld [vmem:[#allocation7 + $0xe8] sm:$0xf]
    %v506 = vld [vmem:[#allocation7 + $0xec] sm:$0xf]
    %v507 = vld [vmem:[#allocation7 + $0xf0] sm:$0xf]
    %v508 = vld [vmem:[#allocation7 + $0xf4] sm:$0xf]
    %v509 = vld [vmem:[#allocation7 + $0xf8] sm:$0xf]
    %v510 = vld [vmem:[#allocation7 + $0xfc] sm:$0xf]
    %v511 = vld [vmem:[%s4] sm:$0x1]
    %v513 = vlaneseq
    %v514 = vshrl.u32 %v513, 7
    %v515 = vsub.s32 0, %v514
    %v516 = vrot.slane %v511, %v515
    %v582 = vunpack.c.l.b16 %v447
    %v583 = vunpack.c.l.b16 %v448
    %v584 = vunpack.c.l.b16 %v449
    %v585 = vunpack.c.l.b16 %v450
    %v586 = vunpack.c.l.b16 %v451
    %v587 = vunpack.c.l.b16 %v452
    %v588 = vunpack.c.l.b16 %v453
    %v589 = vunpack.c.l.b16 %v454
    %v590 = vunpack.c.l.b16 %v455
    %v591 = vunpack.c.l.b16 %v456
    %v592 = vunpack.c.l.b16 %v457
    %v593 = vunpack.c.l.b16 %v458
    %v594 = vunpack.c.l.b16 %v459
    %v595 = vunpack.c.l.b16 %v460
    %v596 = vunpack.c.l.b16 %v461
    %v597 = vunpack.c.l.b16 %v462
    %v598 = vunpack.c.l.b16 %v463
    %v599 = vunpack.c.l.b16 %v464
    %v600 = vunpack.c.l.b16 %v465
    %v601 = vunpack.c.l.b16 %v466
    %v602 = vunpack.c.l.b16 %v467
    %v603 = vunpack.c.l.b16 %v468
    %v604 = vunpack.c.l.b16 %v469
    %v605 = vunpack.c.l.b16 %v470
    %v606 = vunpack.c.l.b16 %v471
    %v607 = vunpack.c.l.b16 %v472
    %v608 = vunpack.c.l.b16 %v473
    %v609 = vunpack.c.l.b16 %v474
    %v610 = vunpack.c.l.b16 %v475
    %v611 = vunpack.c.l.b16 %v476
    %v612 = vunpack.c.l.b16 %v477
    %v613 = vunpack.c.l.b16 %v478
    %v614 = vunpack.c.l.b16 %v479
    %v615 = vunpack.c.l.b16 %v480
    %v616 = vunpack.c.l.b16 %v481
    %v617 = vunpack.c.l.b16 %v482
    %v618 = vunpack.c.l.b16 %v483
    %v619 = vunpack.c.l.b16 %v484
    %v620 = vunpack.c.l.b16 %v485
    %v621 = vunpack.c.l.b16 %v486
    %v622 = vunpack.c.l.b16 %v487
    %v623 = vunpack.c.l.b16 %v488
    %v624 = vunpack.c.l.b16 %v489
    %v625 = vunpack.c.l.b16 %v490
    %v626 = vunpack.c.l.b16 %v491
    %v627 = vunpack.c.l.b16 %v492
    %v628 = vunpack.c.l.b16 %v493
    %v629 = vunpack.c.l.b16 %v494
    %v630 = vunpack.c.l.b16 %v495
    %v631 = vunpack.c.l.b16 %v496
    %v632 = vunpack.c.l.b16 %v497
    %v633 = vunpack.c.l.b16 %v498
    %v634 = vunpack.c.l.b16 %v499
    %v635 = vunpack.c.l.b16 %v500
    %v636 = vunpack.c.l.b16 %v501
    %v637 = vunpack.c.l.b16 %v502
    %v638 = vunpack.c.l.b16 %v503
    %v639 = vunpack.c.l.b16 %v504
    %v640 = vunpack.c.l.b16 %v505
    %v641 = vunpack.c.l.b16 %v506
    %v642 = vunpack.c.l.b16 %v507
    %v643 = vunpack.c.l.b16 %v508
    %v644 = vunpack.c.l.b16 %v509
    %v645 = vunpack.c.l.b16 %v510
    %v646 = vpack.c.b16 %v583, %v582
    %v647 = vpack.c.b16 %v585, %v584
    %v648 = vpack.c.b16 %v587, %v586
    %v649 = vpack.c.b16 %v589, %v588
    %v650 = vpack.c.b16 %v591, %v590
    %v651 = vpack.c.b16 %v593, %v592
    %v652 = vpack.c.b16 %v595, %v594
    %v653 = vpack.c.b16 %v597, %v596
    %v654 = vpack.c.b16 %v599, %v598
    %v655 = vpack.c.b16 %v601, %v600
    %v656 = vpack.c.b16 %v603, %v602
    %v657 = vpack.c.b16 %v605, %v604
    %v658 = vpack.c.b16 %v607, %v606
    %v659 = vpack.c.b16 %v609, %v608
    %v660 = vpack.c.b16 %v611, %v610
    %v661 = vpack.c.b16 %v613, %v612
    %v662 = vpack.c.b16 %v615, %v614
    %v663 = vpack.c.b16 %v617, %v616
    %v664 = vpack.c.b16 %v619, %v618
    %v665 = vpack.c.b16 %v621, %v620
    %v666 = vpack.c.b16 %v623, %v622
    %v667 = vpack.c.b16 %v625, %v624
    %v668 = vpack.c.b16 %v627, %v626
    %v669 = vpack.c.b16 %v629, %v628
    %v670 = vpack.c.b16 %v631, %v630
    %v671 = vpack.c.b16 %v633, %v632
    %v672 = vpack.c.b16 %v635, %v634
    %v673 = vpack.c.b16 %v637, %v636
    %v674 = vpack.c.b16 %v639, %v638
    %v675 = vpack.c.b16 %v641, %v640
    %v676 = vpack.c.b16 %v643, %v642
    %v677 = vpack.c.b16 %v645, %v644
    %710 = vmatprep.subr.bf16.mxu0 0
    %711 = vmatpush1.bf16.msra.mxu0 %v646
    %712 = vmatprep.subr.bf16.mxu0 0
    %713 = vmatpush1.bf16.msra.mxu0 %v647
    %714 = vmatprep.subr.bf16.mxu0 0
    %715 = vmatpush1.bf16.msra.mxu0 %v648
    %716 = vmatprep.subr.bf16.mxu0 0
    %717 = vmatpush1.bf16.msra.mxu0 %v649
    %718 = vmatprep.subr.bf16.mxu0 0
    %719 = vmatpush1.bf16.msra.mxu0 %v650
    %720 = vmatprep.subr.bf16.mxu0 0
    %721 = vmatpush1.bf16.msra.mxu0 %v651
    %722 = vmatprep.subr.bf16.mxu0 0
    %723 = vmatpush1.bf16.msra.mxu0 %v652
    %724 = vmatprep.subr.bf16.mxu0 0
    %725 = vmatpush1.bf16.msra.mxu0 %v653
    %726 = vmatprep.subr.bf16.mxu0 0
    %727 = vmatpush1.bf16.msra.mxu0 %v654
    %728 = vmatprep.subr.bf16.mxu0 0
    %729 = vmatpush1.bf16.msra.mxu0 %v655
    %730 = vmatprep.subr.bf16.mxu0 0
    %731 = vmatpush1.bf16.msra.mxu0 %v656
    %732 = vmatprep.subr.bf16.mxu0 0
    %733 = vmatpush1.bf16.msra.mxu0 %v657
    %734 = vmatprep.subr.bf16.mxu0 0
    %735 = vmatpush1.bf16.msra.mxu0 %v658
    %736 = vmatprep.subr.bf16.mxu0 0
    %737 = vmatpush1.bf16.msra.mxu0 %v659
    %738 = vmatprep.subr.bf16.mxu0 0
    %739 = vmatpush1.bf16.msra.mxu0 %v660
    %740 = vmatprep.subr.bf16.mxu0 0
    %741 = vmatpush1.bf16.msra.mxu0 %v661
    %742 = vmatprep.mubr.bf16.mxu0 %v444
    %743 = vmatmul.mubr.bf16.gmra.mrb[0].mxu0 %v443
    %v744 = vpop.f32.mrb[0].mxu0
    %v745 = vadd.f32 %v516, %v744
    %v746 = vpop.f32.mrb[0].mxu0
    %v747 = vpop.f32.mrb[0].mxu0
    %v748 = vadd.f32 %v516, %v747
    %v749 = vpop.f32.mrb[0].mxu0
    %750 = vdwg.mxu0
    %751 = vmatprep.subr.bf16.mxu0 0
    %752 = vmatpush1.bf16.msra.mxu0 %v662
    %753 = vmatprep.subr.bf16.mxu0 0
    %754 = vmatpush1.bf16.msra.mxu0 %v663
    %755 = vmatprep.subr.bf16.mxu0 0
    %756 = vmatpush1.bf16.msra.mxu0 %v664
    %757 = vmatprep.subr.bf16.mxu0 0
    %758 = vmatpush1.bf16.msra.mxu0 %v665
    %759 = vmatprep.subr.bf16.mxu0 0
    %760 = vmatpush1.bf16.msra.mxu0 %v666
    %761 = vmatprep.subr.bf16.mxu0 0
    %762 = vmatpush1.bf16.msra.mxu0 %v667
    %763 = vmatprep.subr.bf16.mxu0 0
    %764 = vmatpush1.bf16.msra.mxu0 %v668
    %765 = vmatprep.subr.bf16.mxu0 0
    %766 = vmatpush1.bf16.msra.mxu0 %v669
    %767 = vmatprep.subr.bf16.mxu0 0
    %768 = vmatpush1.bf16.msra.mxu0 %v670
    %769 = vmatprep.subr.bf16.mxu0 0
    %770 = vmatpush1.bf16.msra.mxu0 %v671
    %771 = vmatprep.subr.bf16.mxu0 0
    %772 = vmatpush1.bf16.msra.mxu0 %v672
    %773 = vmatprep.subr.bf16.mxu0 0
    %774 = vmatpush1.bf16.msra.mxu0 %v673
    %775 = vmatprep.subr.bf16.mxu0 0
    %776 = vmatpush1.bf16.msra.mxu0 %v674
    %777 = vmatprep.subr.bf16.mxu0 0
    %778 = vmatpush1.bf16.msra.mxu0 %v675
    %779 = vmatprep.subr.bf16.mxu0 0
    %780 = vmatpush1.bf16.msra.mxu0 %v676
    %781 = vmatprep.subr.bf16.mxu0 0
    %782 = vmatpush1.bf16.msra.mxu0 %v677
    %783 = vmatprep.mubr.bf16.mxu0 %v446
    %784 = vmatmul.mubr.bf16.gmra.mrb[0].mxu0 %v445
    %v785 = vpop.f32.mrb[0].mxu0
    %v786 = vadd.f32 %v745, %v785
    %v787 = vpop.f32.mrb[0].mxu0
    %v788 = vpop.f32.mrb[0].mxu0
    %v789 = vadd.f32 %v748, %v788
    %v790 = vpop.f32.mrb[0].mxu0
    %791 = vdwg.mxu0
    %792 = vst [vmem:[#allocation8] sm:$0xff] %v786
    %793 = vst [vmem:[#allocation8 + $0x8] sm:$0xff] %v789
    // Predicated region
    $region34: #{tpu_custom_call.1} parent=1 // pred_check
      _
    $region35: #{tpu_custom_call.1} parent=1 // pred_check_branch
      %795 = sbr.rel (0) target = $region37
    $region36: #{tpu_custom_call.1} parent=1 // pred_region
      %s797 = ssub.s32 256, 256
      %798 = vsyncadd [#allocation4], %s797
      %s799 = sshll.u32 [#allocation8], 4
      %s800 = int_to_ptr.vmem [resolvable:$true] %s799
      %805 = dma.vmem_to_hbm [thread:$0]  %s800, 256, %s5, [#allocation4], 128, 128, 8
    $region37: #{tpu_custom_call.1} parent=1 // pred_fallthru
      _
    // Predicated region
    $region38: #{tpu_custom_call.1} parent=1 // pred_check
      _
    $region39: #{tpu_custom_call.1} parent=1 // pred_check_branch
      %807 = sbr.rel (0) target = $region41
    $region40: #{tpu_custom_call.1} parent=1 // pred_region
      %808 = dma.done [#allocation4], 256
    $region41: #{tpu_custom_call.1} parent=1 // pred_fallthru
      _
    %809 = vsyncpa [#allocation3], 1
    %810 = vsyncpa [#allocation6], 1
    %811 = vsyncpa [#allocation4], 1

</llo_original>
